<compile_context>
chip_gen: v7x
topology: tpu7x:2x2x1
jax: 0.10.0
libtpu: 0.0.40
codegen_flags: <defaults>
</compile_context>

<pallas_src>
import jax
import jax.numpy as jnp
from jax.experimental import pallas as pl
from jax.experimental.pallas import tpu as pltpu


def _round_up(x: int, m: int) -> int:
    return (x + m - 1) // m * m


def _pixel_shuffle_kernel(x_ref, o_ref):
    # x_ref: (Ct, Wo, s) block of the (B, C, Wo, s) view of x.
    # o_ref: (Ct, s, Wo) block of the (B, C, s, Wo) view of the output.
    ct = x_ref.shape[0]
    for ci in range(ct):  # static unroll; Ct is kept small (<= 16)
        # per channel: out[ci, r, w] = x[ci, w, r]
        o_ref[ci] = x_ref[ci].T


def _pick_channel_tile(C: int, Wo: int, s: int, itemsize: int,
                       vmem_budget_bytes: int = 8 * 1024 * 1024,
                       unroll_cap: int = 16) -> int:
    """Largest divisor of C whose double-buffered block footprint fits the budget."""
    # Per-channel VMEM footprint of input + output blocks, accounting for the
    # (8, 128) tile padding Mosaic applies to the last two dims of each block.
    per_chan = (
        _round_up(Wo, 8) * _round_up(s, 128)      # input block  (.., Wo, s)
        + _round_up(s, 8) * _round_up(Wo, 128)    # output block (.., s, Wo)
    ) * itemsize * 2                              # x2: double buffering
    cap = max(1, min(unroll_cap, vmem_budget_bytes // per_chan, C))
    for d in range(int(cap), 0, -1):              # largest divisor of C <= cap
        if C % d == 0:
            return d
    return 1


def pixel_shuffle(x: jax.Array, scale_factor: int) -> jax.Array:
    B, C, W = x.shape
    s = int(scale_factor)
    assert W % s == 0, "width must be divisible by scale_factor"
    Wo = W // s

    itemsize = jnp.dtype(x.dtype).itemsize
    Ct = _pick_channel_tile(C, Wo, s, itemsize)

    # Glue: pure view reshape (no data movement).
    x4 = x.reshape(B, C, Wo, s)

    out4 = pl.pallas_call(
        _pixel_shuffle_kernel,
        out_shape=jax.ShapeDtypeStruct((B, C, s, Wo), x.dtype),
        grid=(B, C // Ct),
        in_specs=[
            # Last two block dims equal the full array dims -> (8,128)-rule exempt,
            # and each block is a contiguous (Ct*W)-element region of HBM.
            pl.BlockSpec((None, Ct, Wo, s), lambda b, c: (b, c, 0, 0)),
        ],
        # Lane dim of the output block is Wo -> dense (unmasked) stores for
        # realistic Wo (multiples of 128); also a contiguous HBM region.
        out_specs=pl.BlockSpec((None, Ct, s, Wo), lambda b, c: (b, c, 0, 0)),
        compiler_params=pltpu.CompilerParams(
            dimension_semantics=("parallel", "parallel")
        ),
    )(x4)

    # Glue: pure view reshape back to (B, C*s, W//s).
    return out4.reshape(B, C * s, Wo)


def _pixel_shuffle_ref(x: jax.Array, s: int) -> jax.Array:
    B, C, W = x.shape
    Wo = W // s
    return jnp.transpose(x.reshape(B, C, Wo, s), (0, 1, 3, 2)).reshape(B, C * s, Wo)


if __name__ == "__main__":
    key = jax.random.PRNGKey(0)
    B, C, W = 2, 4, 16
    scale = 2

    x = jax.random.normal(key, (B, C, W), dtype=jnp.float32)

    out = jax.block_until_ready(pixel_shuffle(x, scale))

    # Verify against a pure-JAX reference of the PyTorch forward.
    ref = _pixel_shuffle_ref(x, scale)
    assert out.shape == (B, C * scale, W // scale), out.shape
    assert out.dtype == x.dtype
    assert bool(jnp.array_equal(out, ref)), "mismatch vs reference"

    print("KERNEL_OK")
</pallas_src>

<mosaic_0001>
module attributes {stable_mosaic.version = 11 : i64} {
  func.func @_pixel_shuffle_kernel(%arg0: i32, %arg1: i32, %arg2: memref<1x4x8x2xf32, #tpu.memory_space<vmem>>, %arg3: memref<1x4x2x8xf32, #tpu.memory_space<vmem>>) attributes {dimension_semantics = [#tpu.dimension_semantics<parallel>, #tpu.dimension_semantics<parallel>], iteration_bounds = array<i64: 2, 1>, scalar_prefetch = 0 : i64, scratch_operands = 0 : i64, tpu.core_type = #tpu.core_type<tc>, window_params = [{transform_indices = @transform_0, window_bounds = array<i64: 1, 4, 8, 2>}, {transform_indices = @transform_1, window_bounds = array<i64: 1, 4, 2, 8>}]} {
    %c0 = arith.constant 0 : index
    %c0_0 = arith.constant 0 : index
    %c0_1 = arith.constant 0 : index
    %c0_2 = arith.constant 0 : index
    %0 = vector.load %arg2[%c0, %c0_0, %c0_1, %c0_2] : memref<1x4x8x2xf32, #tpu.memory_space<vmem>>, vector<1x1x8x2xf32>
    %1 = vector.shape_cast %0 : vector<1x1x8x2xf32> to vector<8x2xf32>
    %2 = tpu.transpose %1, [1, 0] : vector<8x2xf32> -> vector<2x8xf32>
    %c0_3 = arith.constant 0 : index
    %c0_4 = arith.constant 0 : index
    %c0_5 = arith.constant 0 : index
    %c0_6 = arith.constant 0 : index
    %3 = vector.load %arg3[%c0_3, %c0_4, %c0_5, %c0_6] : memref<1x4x2x8xf32, #tpu.memory_space<vmem>>, vector<1x1x2x8xf32>
    %4 = vector.shape_cast %3 : vector<1x1x2x8xf32> to vector<2x8xf32>
    %5 = vector.shape_cast %2 : vector<2x8xf32> to vector<1x1x2x8xf32>
    tpu.vector_store %arg3[%c0_3, %c0_4, %c0_5, %c0_6], %5 {strides = array<i32>} : memref<1x4x2x8xf32, #tpu.memory_space<vmem>>, vector<1x1x2x8xf32>,
    %c0_7 = arith.constant 0 : index
    %c1 = arith.constant 1 : index
    %c0_8 = arith.constant 0 : index
    %c0_9 = arith.constant 0 : index
    %6 = vector.load %arg2[%c0_7, %c1, %c0_8, %c0_9] : memref<1x4x8x2xf32, #tpu.memory_space<vmem>>, vector<1x1x8x2xf32>
    %7 = vector.shape_cast %6 : vector<1x1x8x2xf32> to vector<8x2xf32>
    %8 = tpu.transpose %7, [1, 0] : vector<8x2xf32> -> vector<2x8xf32>
    %c0_10 = arith.constant 0 : index
    %c1_11 = arith.constant 1 : index
    %c0_12 = arith.constant 0 : index
    %c0_13 = arith.constant 0 : index
    %9 = vector.load %arg3[%c0_10, %c1_11, %c0_12, %c0_13] : memref<1x4x2x8xf32, #tpu.memory_space<vmem>>, vector<1x1x2x8xf32>
    %10 = vector.shape_cast %9 : vector<1x1x2x8xf32> to vector<2x8xf32>
    %11 = vector.shape_cast %8 : vector<2x8xf32> to vector<1x1x2x8xf32>
    tpu.vector_store %arg3[%c0_10, %c1_11, %c0_12, %c0_13], %11 {strides = array<i32>} : memref<1x4x2x8xf32, #tpu.memory_space<vmem>>, vector<1x1x2x8xf32>,
    %c0_14 = arith.constant 0 : index
    %c2 = arith.constant 2 : index
    %c0_15 = arith.constant 0 : index
    %c0_16 = arith.constant 0 : index
    %12 = vector.load %arg2[%c0_14, %c2, %c0_15, %c0_16] : memref<1x4x8x2xf32, #tpu.memory_space<vmem>>, vector<1x1x8x2xf32>
    %13 = vector.shape_cast %12 : vector<1x1x8x2xf32> to vector<8x2xf32>
    %14 = tpu.transpose %13, [1, 0] : vector<8x2xf32> -> vector<2x8xf32>
    %c0_17 = arith.constant 0 : index
    %c2_18 = arith.constant 2 : index
    %c0_19 = arith.constant 0 : index
    %c0_20 = arith.constant 0 : index
    %15 = vector.load %arg3[%c0_17, %c2_18, %c0_19, %c0_20] : memref<1x4x2x8xf32, #tpu.memory_space<vmem>>, vector<1x1x2x8xf32>
    %16 = vector.shape_cast %15 : vector<1x1x2x8xf32> to vector<2x8xf32>
    %17 = vector.shape_cast %14 : vector<2x8xf32> to vector<1x1x2x8xf32>
    tpu.vector_store %arg3[%c0_17, %c2_18, %c0_19, %c0_20], %17 {strides = array<i32>} : memref<1x4x2x8xf32, #tpu.memory_space<vmem>>, vector<1x1x2x8xf32>,
    %c0_21 = arith.constant 0 : index
    %c3 = arith.constant 3 : index
    %c0_22 = arith.constant 0 : index
    %c0_23 = arith.constant 0 : index
    %18 = vector.load %arg2[%c0_21, %c3, %c0_22, %c0_23] : memref<1x4x8x2xf32, #tpu.memory_space<vmem>>, vector<1x1x8x2xf32>
    %19 = vector.shape_cast %18 : vector<1x1x8x2xf32> to vector<8x2xf32>
    %20 = tpu.transpose %19, [1, 0] : vector<8x2xf32> -> vector<2x8xf32>
    %c0_24 = arith.constant 0 : index
    %c3_25 = arith.constant 3 : index
    %c0_26 = arith.constant 0 : index
    %c0_27 = arith.constant 0 : index
    %21 = vector.load %arg3[%c0_24, %c3_25, %c0_26, %c0_27] : memref<1x4x2x8xf32, #tpu.memory_space<vmem>>, vector<1x1x2x8xf32>
    %22 = vector.shape_cast %21 : vector<1x1x2x8xf32> to vector<2x8xf32>
    %23 = vector.shape_cast %20 : vector<2x8xf32> to vector<1x1x2x8xf32>
    tpu.vector_store %arg3[%c0_24, %c3_25, %c0_26, %c0_27], %23 {strides = array<i32>} : memref<1x4x2x8xf32, #tpu.memory_space<vmem>>, vector<1x1x2x8xf32>,
    return
  }
  func.func @transform_0(%arg0: i32, %arg1: i32) -> (i32, i32, i32, i32) {
    %c0_i32 = arith.constant 0 : i32
    %c0_i32_0 = arith.constant 0 : i32
    %c0_i32_1 = arith.constant 0 : i32
    return %arg0, %arg1, %c0_i32, %c0_i32_0 : i32, i32, i32, i32
  }
  func.func @transform_1(%arg0: i32, %arg1: i32) -> (i32, i32, i32, i32) {
    %c0_i32 = arith.constant 0 : i32
    %c0_i32_0 = arith.constant 0 : i32
    %c0_i32_1 = arith.constant 0 : i32
    return %arg0, %arg1, %c0_i32, %c0_i32_0 : i32, i32, i32, i32
  }
}

</mosaic_0001>

<llo_original>
// kernel: tpu_custom_call.1
$region0: #{tpu_custom_call.1}
  #allocation0 [shape = 'u32[]', space=smem, size = 0x4, offset = 0x4, fixed_abs, tag = 'smem constant byte address 0x4 - core index']
  #allocation1 [shape = 'u32[144,128]{1,0:T(1,128)}', space=vmem, size = 0x12000, scoped, tag = 'internal scratch']
  %s0 = inlined_call_operand.vmem [shape: f32[2,4,8,2], index: 0, kind: input, shape index: {}]
  %s1 = inlined_call_operand.hbm [shape: f32[2,4,2,8], index: 1, kind: output, shape index: {}]
  %s2 = sld [smem:[#allocation0]]
  $region37: #{tpu_custom_call.1} parent=0
    _
  %s4 = ssub.s32 1, %s2
  %s5 = scalar_select 0, %s4, %s2
  $region1: #{tpu_custom_call.1} parent=0
    #allocation2 [shape = 'u8[8192]{0}', space=vmem, size = 0x2000, scoped, tag = 'output window, operand 0']
    #allocation3 [shape = 's32[2]{0}', space=sflag, size = 0x8, scoped, tag = 'scoped memory for tpu_custom_call.1']
    %6 = vsyncpa [#allocation3], 0
    %s7 = scalar_lea.sflag [#allocation3], 1
    %8 = vsyncpa %s7, 0
    loop: start=0, step=1, limit=4
    $region2: #{tpu_custom_call.1} parent=1 // loop_pre_header
      _
    $region3: #{tpu_custom_call.1} parent=1 // loop_header
      %s10 = sphi 0, %s14
      %p11 = scmp.ge.s32.totalorder %s10, 4
      %s17 = sphi 0, %s29
      %s18 = sphi 0, %s25
      %s19 = sphi 0, %s17
      %s20 = sphi 0, %s18
      %s21 = sphi 0, %s19
      %s22 = sphi 0, %s20
      %s34 = sphi 0, %s36
      %s37 = sphi 0, %s34
      %s38 = sphi 0, %s37
      %s54 = sphi 0, %s38
      %s62 = sphi 0, %s64
      %s65 = sphi 0, %s62
      %s66 = sphi 0, %s65
      %s82 = sphi 0, %s66
    $region4: #{tpu_custom_call.1} parent=1 // loop_header_branch
      %13 = sbr.rel (%p11) target = $region8
    $region5: #{tpu_custom_call.1} parent=1 // loop_body
      %s15 = ssub.s32 %s10, 1
      %s16 = ssub.s32 %s10, 2
      %s23 = sadd.s32 1, %s18
      %p24 = scmp.ge.s32.totalorder %s23, 1
      %s25 = scalar_select %p24, 0, %s23
      %s26 = sadd.s32 1, %s17
      %s27 = scalar_select %p24, %s26, %s17
      %p28 = scmp.ge.s32.totalorder %s27, 2
      %s29 = scalar_select %p28, 0, %s27
      %s30 = ssub.s32 %s17, %s29
      %s31 = ssub.s32 %s18, %s25
      %s32 = sor.u32 %s30, %s31
      %p33 = scmp.eq.s32.totalorder %s32, 0
      %s35 = sadd.s32 %s34, 1
      %s36 = scalar_select %p33, %s34, %s35
      %p39 = pneg %p33
      %p40 = scmp.eq.s32.totalorder %s10, 1
      %p41 = por %p39, %p40
      %p42 = scmp.ne.s32.totalorder %s34, %s37
      %p43 = scmp.eq.s32.totalorder %s10, 0
      %p44 = por %p42, %p43
      %p45 = scmp.ne.s32.totalorder %s34, %s37
      %p46 = scmp.eq.s32.totalorder %s15, 1
      %p47 = por %p45, %p46
      %p48 = scmp.ne.s32.totalorder %s37, %s38
      %p49 = scmp.eq.s32.totalorder %s15, 0
      %p50 = por %p48, %p49
      %p51 = scmp.ne.s32.totalorder %s37, %s38
      %p52 = scmp.eq.s32.totalorder %s16, 1
      %p53 = por %p51, %p52
      %p55 = scmp.ne.s32.totalorder %s38, %s54
      %p56 = scmp.eq.s32.totalorder %s16, 0
      %p57 = por %p55, %p56
      %s58 = ssub.s32 %s17, %s29
      %s59 = ssub.s32 %s18, %s25
      %s60 = sor.u32 %s58, %s59
      %p61 = scmp.eq.s32.totalorder %s60, 0
      %s63 = sadd.s32 %s62, 1
      %s64 = scalar_select %p61, %s62, %s63
      %p67 = pneg %p61
      %p68 = scmp.eq.s32.totalorder %s10, 1
      %p69 = por %p67, %p68
      %p70 = scmp.ne.s32.totalorder %s62, %s65
      %p71 = scmp.eq.s32.totalorder %s10, 0
      %p72 = por %p70, %p71
      %p73 = scmp.ne.s32.totalorder %s62, %s65
      %p74 = scmp.eq.s32.totalorder %s15, 1
      %p75 = por %p73, %p74
      %p76 = scmp.ne.s32.totalorder %s65, %s66
      %p77 = scmp.eq.s32.totalorder %s15, 0
      %p78 = por %p76, %p77
      %p79 = scmp.ne.s32.totalorder %s65, %s66
      %p80 = scmp.eq.s32.totalorder %s16, 1
      %p81 = por %p79, %p80
      %p83 = scmp.ne.s32.totalorder %s66, %s82
      %p84 = scmp.eq.s32.totalorder %s16, 0
      %p85 = por %p83, %p84
      %p86 = scmp.le.s32.totalorder 1, %s10
      %p87 = scmp.lt.s32.totalorder %s10, 3
      %p88 = pnand %p86, %p87
      %p89 = pneg %p88
      // Predicated region
      $region9: #{tpu_custom_call.1} parent=5 // pred_check
        _
      $region10: #{tpu_custom_call.1} parent=5 // pred_check_branch
        %91 = sbr.rel (%p88) target = $region12
      $region11: #{tpu_custom_call.1} parent=5 // pred_region
        %s92 = ssub.s32 %s10, 1
      $region12: #{tpu_custom_call.1} parent=5 // pred_fallthru
        _
      %p93 = scmp.lt.s32.totalorder %s10, 2
      // Predicated region
      $region13: #{tpu_custom_call.1} parent=5 // pred_check
        %p94 = pneg %p93
      $region14: #{tpu_custom_call.1} parent=5 // pred_check_branch
        %96 = sbr.rel (%p94) target = $region16
      $region15: #{tpu_custom_call.1} parent=5 // pred_region
        // Predicated region
        $region17: #{tpu_custom_call.1} parent=15 // pred_check
          %p97 = pneg %p44
        $region18: #{tpu_custom_call.1} parent=15 // pred_check_branch
          %99 = sbr.rel (%p97) target = $region20
        $region19: #{tpu_custom_call.1} parent=15 // pred_region
          %s100 = smul.u32 4, %s18
          %p101 = scmp.lt.s32.totalorder %s17, 1
          %s102 = scalar_select %p101, %s17, 1
          %p103 = scmp.lt.s32.totalorder %s100, 3
          %s104 = scalar_select %p103, %s100, 3
          %s105 = smul.addr %s102, 4
          %s106 = sadd.s32 %s104, %s105
          %s107 = smul.addr %s106, 8
          %s108 = scalar_lea.vmem %s0, %s107
          %s109 = smul.u32 4, %s18
        $region20: #{tpu_custom_call.1} parent=15 // pred_fallthru
          _
      $region16: #{tpu_custom_call.1} parent=5 // pred_fallthru
        _
      %p110 = scmp.le.s32.totalorder 1, %s10
      %p111 = scmp.lt.s32.totalorder %s10, 3
      %p112 = pnand %p110, %p111
      %p113 = pneg %p112
      // Predicated region
      $region21: #{tpu_custom_call.1} parent=5 // pred_check
        _
      $region22: #{tpu_custom_call.1} parent=5 // pred_check_branch
        %115 = sbr.rel (%p112) target = $region24
      $region23: #{tpu_custom_call.1} parent=5 // pred_region
        %s116 = ssub.s32 %s10, 1
        %s117 = smul.u32 4, %s20
        %p118 = scmp.lt.s32.totalorder %s19, 1
        %s119 = scalar_select %p118, %s19, 1
        %p120 = scmp.lt.s32.totalorder %s117, 3
        %s121 = scalar_select %p120, %s117, 3
        %s122 = smul.addr %s119, 4
        %s123 = sadd.s32 %s121, %s122
        %s124 = smul.addr %s123, 8
        %s125 = scalar_lea.vmem %s0, %s124
        %p126 = pneg %p50
        %p127 = pneg %p47
        %p128 = pneg %p78
        %p129 = pneg %p75
        %s130 = sand.u32 %s65, 1
        %s131 = scalar_lea.sflag [#allocation3], %s130
        %s132 = sand.u32 %s65, 1
        %s133 = smul.addr %s132, 8
        %s134 = scalar_lea.vmem [#allocation2], %s133
        %s135 = smul.u32 4, %s20
        %p136 = scmp.lt.s32.totalorder %s19, 1
        %s137 = scalar_select %p136, %s19, 1
        %p138 = scmp.lt.s32.totalorder %s135, 3
        %s139 = scalar_select %p138, %s135, 3
        %s140 = smul.addr %s137, 4
        %s141 = sadd.s32 %s139, %s140
        %s142 = smul.addr %s141, 8
        %s143 = scalar_lea.vmem %s0, %s142
        %s144 = smul.u32 4, %s20
        %s145 = smul.u32 4, %s20
        %v146 = vld [vmem:[%s143] sm:$0xff]
        %147 = vxpose.xlu0.b32.start [1/16] %v146, 128
        %148 = vxpose.xlu0.b32.cont [2/16] 0.0, 128
        %149 = vxpose.xlu0.b32.cont [3/16] 0.0, 128
        %150 = vxpose.xlu0.b32.cont [4/16] 0.0, 128
        %151 = vxpose.xlu0.b32.cont [5/16] 0.0, 128
        %152 = vxpose.xlu0.b32.cont [6/16] 0.0, 128
        %153 = vxpose.xlu0.b32.cont [7/16] 0.0, 128
        %154 = vxpose.xlu0.b32.cont [8/16] 0.0, 128
        %155 = vxpose.xlu0.b32.cont [9/16] 0.0, 128
        %156 = vxpose.xlu0.b32.cont [10/16] 0.0, 128
        %157 = vxpose.xlu0.b32.cont [11/16] 0.0, 128
        %158 = vxpose.xlu0.b32.cont [12/16] 0.0, 128
        %159 = vxpose.xlu0.b32.cont [13/16] 0.0, 128
        %160 = vxpose.xlu0.b32.cont [14/16] 0.0, 128
        %161 = vxpose.xlu0.b32.cont [15/16] 0.0, 128
        %162 = vxpose.xlu0.b32.end [16/16] 0.0, 128
        %v163 = vpop.trf.xlu0
        %v164 = vpop.trf.xlu0
        %v165 = vpop.trf.xlu0
        %v166 = vpop.trf.xlu0
        %v167 = vpop.trf.xlu0
        %v168 = vpop.trf.xlu0
        %v169 = vpop.trf.xlu0
        %v170 = vpop.trf.xlu0
        %v171 = vpop.trf.xlu0
        %v172 = vpop.trf.xlu0
        %v173 = vpop.trf.xlu0
        %v174 = vpop.trf.xlu0
        %v175 = vpop.trf.xlu0
        %v176 = vpop.trf.xlu0
        %v177 = vpop.trf.xlu0
        %v178 = vpop.trf.xlu0
        %vm179 = vcmask 58368
        %180 = vst.msk [vmem:[%s134] sm:$0x3] %vm179, %v163
        %s181 = scalar_lea.vmem %s143, 8
        %v182 = vld [vmem:[%s181] sm:$0xff]
        %183 = vxpose.xlu0.b32.start [1/16] %v182, 128
        %184 = vxpose.xlu0.b32.cont [2/16] 0.0, 128
        %185 = vxpose.xlu0.b32.cont [3/16] 0.0, 128
        %186 = vxpose.xlu0.b32.cont [4/16] 0.0, 128
        %187 = vxpose.xlu0.b32.cont [5/16] 0.0, 128
        %188 = vxpose.xlu0.b32.cont [6/16] 0.0, 128
        %189 = vxpose.xlu0.b32.cont [7/16] 0.0, 128
        %190 = vxpose.xlu0.b32.cont [8/16] 0.0, 128
        %191 = vxpose.xlu0.b32.cont [9/16] 0.0, 128
        %192 = vxpose.xlu0.b32.cont [10/16] 0.0, 128
        %193 = vxpose.xlu0.b32.cont [11/16] 0.0, 128
        %194 = vxpose.xlu0.b32.cont [12/16] 0.0, 128
        %195 = vxpose.xlu0.b32.cont [13/16] 0.0, 128
        %196 = vxpose.xlu0.b32.cont [14/16] 0.0, 128
        %197 = vxpose.xlu0.b32.cont [15/16] 0.0, 128
        %198 = vxpose.xlu0.b32.end [16/16] 0.0, 128
        %v199 = vpop.trf.xlu0
        %v200 = vpop.trf.xlu0
        %v201 = vpop.trf.xlu0
        %v202 = vpop.trf.xlu0
        %v203 = vpop.trf.xlu0
        %v204 = vpop.trf.xlu0
        %v205 = vpop.trf.xlu0
        %v206 = vpop.trf.xlu0
        %v207 = vpop.trf.xlu0
        %v208 = vpop.trf.xlu0
        %v209 = vpop.trf.xlu0
        %v210 = vpop.trf.xlu0
        %v211 = vpop.trf.xlu0
        %v212 = vpop.trf.xlu0
        %v213 = vpop.trf.xlu0
        %v214 = vpop.trf.xlu0
        %s215 = scalar_lea.vmem %s134, 2 [#allocation2]
        %216 = vst.msk [vmem:[%s215] sm:$0x3] %vm179, %v199
        %s217 = scalar_lea.vmem %s143, 16
        %v218 = vld [vmem:[%s217] sm:$0xff]
        %219 = vxpose.xlu0.b32.start [1/16] %v218, 128
        %220 = vxpose.xlu0.b32.cont [2/16] 0.0, 128
        %221 = vxpose.xlu0.b32.cont [3/16] 0.0, 128
        %222 = vxpose.xlu0.b32.cont [4/16] 0.0, 128
        %223 = vxpose.xlu0.b32.cont [5/16] 0.0, 128
        %224 = vxpose.xlu0.b32.cont [6/16] 0.0, 128
        %225 = vxpose.xlu0.b32.cont [7/16] 0.0, 128
        %226 = vxpose.xlu0.b32.cont [8/16] 0.0, 128
        %227 = vxpose.xlu0.b32.cont [9/16] 0.0, 128
        %228 = vxpose.xlu0.b32.cont [10/16] 0.0, 128
        %229 = vxpose.xlu0.b32.cont [11/16] 0.0, 128
        %230 = vxpose.xlu0.b32.cont [12/16] 0.0, 128
        %231 = vxpose.xlu0.b32.cont [13/16] 0.0, 128
        %232 = vxpose.xlu0.b32.cont [14/16] 0.0, 128
        %233 = vxpose.xlu0.b32.cont [15/16] 0.0, 128
        %234 = vxpose.xlu0.b32.end [16/16] 0.0, 128
        %v235 = vpop.trf.xlu0
        %v236 = vpop.trf.xlu0
        %v237 = vpop.trf.xlu0
        %v238 = vpop.trf.xlu0
        %v239 = vpop.trf.xlu0
        %v240 = vpop.trf.xlu0
        %v241 = vpop.trf.xlu0
        %v242 = vpop.trf.xlu0
        %v243 = vpop.trf.xlu0
        %v244 = vpop.trf.xlu0
        %v245 = vpop.trf.xlu0
        %v246 = vpop.trf.xlu0
        %v247 = vpop.trf.xlu0
        %v248 = vpop.trf.xlu0
        %v249 = vpop.trf.xlu0
        %v250 = vpop.trf.xlu0
        %s251 = scalar_lea.vmem %s134, 4 [#allocation2]
        %252 = vst.msk [vmem:[%s251] sm:$0x3] %vm179, %v235
        %s253 = scalar_lea.vmem %s143, 24
        %v254 = vld [vmem:[%s253] sm:$0xff]
        %255 = vxpose.xlu0.b32.start [1/16] %v254, 128
        %256 = vxpose.xlu0.b32.cont [2/16] 0.0, 128
        %257 = vxpose.xlu0.b32.cont [3/16] 0.0, 128
        %258 = vxpose.xlu0.b32.cont [4/16] 0.0, 128
        %259 = vxpose.xlu0.b32.cont [5/16] 0.0, 128
        %260 = vxpose.xlu0.b32.cont [6/16] 0.0, 128
        %261 = vxpose.xlu0.b32.cont [7/16] 0.0, 128
        %262 = vxpose.xlu0.b32.cont [8/16] 0.0, 128
        %263 = vxpose.xlu0.b32.cont [9/16] 0.0, 128
        %264 = vxpose.xlu0.b32.cont [10/16] 0.0, 128
        %265 = vxpose.xlu0.b32.cont [11/16] 0.0, 128
        %266 = vxpose.xlu0.b32.cont [12/16] 0.0, 128
        %267 = vxpose.xlu0.b32.cont [13/16] 0.0, 128
        %268 = vxpose.xlu0.b32.cont [14/16] 0.0, 128
        %269 = vxpose.xlu0.b32.cont [15/16] 0.0, 128
        %270 = vxpose.xlu0.b32.end [16/16] 0.0, 128
        %v271 = vpop.trf.xlu0
        %v272 = vpop.trf.xlu0
        %v273 = vpop.trf.xlu0
        %v274 = vpop.trf.xlu0
        %v275 = vpop.trf.xlu0
        %v276 = vpop.trf.xlu0
        %v277 = vpop.trf.xlu0
        %v278 = vpop.trf.xlu0
        %v279 = vpop.trf.xlu0
        %v280 = vpop.trf.xlu0
        %v281 = vpop.trf.xlu0
        %v282 = vpop.trf.xlu0
        %v283 = vpop.trf.xlu0
        %v284 = vpop.trf.xlu0
        %v285 = vpop.trf.xlu0
        %v286 = vpop.trf.xlu0
        %s287 = scalar_lea.vmem %s134, 6 [#allocation2]
        %288 = vst.msk [vmem:[%s287] sm:$0x3] %vm179, %v271
        %s289 = sand.u32 %s65, 1
        %s290 = scalar_lea.sflag [#allocation3], %s289
        %s291 = sand.u32 %s65, 1
        %s292 = smul.addr %s291, 8
        %s293 = scalar_lea.vmem [#allocation2], %s292
        // Predicated region
        $region25: #{tpu_custom_call.1} parent=23 // pred_check
          %p294 = pneg %p75
        $region26: #{tpu_custom_call.1} parent=23 // pred_check_branch
          %296 = sbr.rel (%p294) target = $region28
        $region27: #{tpu_custom_call.1} parent=23 // pred_region
          %s297 = smul.u32 4, %s20
          %s299 = ssub.s32 128, 128
          %300 = vsyncadd %s290, %s299
          %s301 = smul.addr %s19, 4
          %s302 = sadd.s32 %s297, %s301
          %s303 = smul.addr %s302, 32
          %s304 = scalar_lea.hbm %s1, %s303
          %s305 = sshll.u32 %s293, 4
          %s306 = int_to_ptr.vmem [resolvable:$true] %s305
          %311 = dma.vmem_to_hbm [thread:$0]  %s306, 128, %s304, %s290, 32, 32, 2
        $region28: #{tpu_custom_call.1} parent=23 // pred_fallthru
          _
      $region24: #{tpu_custom_call.1} parent=5 // pred_fallthru
        _
      %p312 = scmp.le.s32.totalorder 2, %s10
      // Predicated region
      $region29: #{tpu_custom_call.1} parent=5 // pred_check
        %p313 = pneg %p312
      $region30: #{tpu_custom_call.1} parent=5 // pred_check_branch
        %315 = sbr.rel (%p313) target = $region32
      $region31: #{tpu_custom_call.1} parent=5 // pred_region
        %s316 = ssub.s32 %s10, 2
        // Predicated region
        $region33: #{tpu_custom_call.1} parent=31 // pred_check
          %p317 = pneg %p81
        $region34: #{tpu_custom_call.1} parent=31 // pred_check_branch
          %319 = sbr.rel (%p317) target = $region36
        $region35: #{tpu_custom_call.1} parent=31 // pred_region
          %s320 = sand.u32 %s66, 1
          %s321 = scalar_lea.sflag [#allocation3], %s320
          %s322 = sand.u32 %s66, 1
          %s323 = smul.addr %s322, 8
          %s324 = scalar_lea.vmem [#allocation2], %s323
          %325 = dma.done %s321, 128
        $region36: #{tpu_custom_call.1} parent=31 // pred_fallthru
          _
      $region32: #{tpu_custom_call.1} parent=5 // pred_fallthru
        _
    $region6: #{tpu_custom_call.1} parent=1 // loop_footer
      %s14 = sadd.s32 1, %s10
    $region7: #{tpu_custom_call.1} parent=1 // loop_footer_branch
      %9 = sbr.rel target = $region3
    $region8: #{tpu_custom_call.1} parent=1 // loop_exit
      _
    %326 = vsyncpa [#allocation3], 1
    %s327 = scalar_lea.sflag [#allocation3], 1
    %328 = vsyncpa %s327, 1

</llo_original>
